<compile_context>
chip_gen: v5e
topology: v5e:2x2
jax: 0.10.0
libtpu: 0.0.40
codegen_flags: <defaults>
</compile_context>

<pallas_src>
import jax
import jax.numpy as jnp
from jax.experimental import pallas as pl
from jax.experimental.pallas import tpu as pltpu


# ----------------------------------------------------------------------------
# Helpers
# ----------------------------------------------------------------------------

def _round_up(x, m):
    return ((x + m - 1) // m) * m


def _sublane_multiple(dtype):
    """Second-minor block-dim multiple required by the dtype packing."""
    itemsize = jnp.dtype(dtype).itemsize
    return max(8, 32 // max(1, itemsize))  # 8 f32, 16 bf16, 32 int8/fp8


def _tpu_generation():
    """Best-effort TPU generation detection (falls back to v6e defaults)."""
    try:
        kind = jax.devices()[0].device_kind.lower()
    except Exception:
        return 6
    for g in (7, 6, 5, 4):
        if "v%d" % g in kind:
            return g
    return 6


def _gen_params():
    """(fast_path_bytes, vmem_budget_bytes, block_out_bytes_target)."""
    g = _tpu_generation()
    if g >= 7:
        # 2 TCs, ~3.2 TB/s HBM, 32 MiB default scoped VMEM (64 MiB physical).
        return (2 << 20, 16 << 20, 4 << 20)
    if g == 6:
        # ~1.4 TB/s HBM, 32 MiB default scoped VMEM (128 MiB physical).
        return (1 << 20, 16 << 20, 4 << 20)
    # v5e and older: 16 MiB default scoped VMEM, ~0.8 TB/s HBM -> conservative.
    return (1 << 20, 8 << 20, 2 << 20)


# ----------------------------------------------------------------------------
# Kernel bodies
# ----------------------------------------------------------------------------

def _make_concat_kernel(dims):
    """Pick the store strategy from the (static) modality widths."""
    off, aligned = 0, True
    for d in dims:
        if off % 128 != 0 or d % 128 != 0:
            aligned = False
        off += d

    if aligned and len(dims) > 1:
        # Every concat boundary sits on a 128-lane register boundary: the
        # per-modality slice stores are full-width, unmasked vst's and avoid
        # any in-register lane shuffling.
        def kernel(*refs):
            in_refs, out_ref = refs[:-1], refs[-1]
            o = 0
            for r in in_refs:
                d = r.shape[-1]
                out_ref[:, o:o + d] = r[...]
                o += d
        return kernel

    # Unaligned boundaries: assemble the tile in-register and emit ONE dense
    # store per output block instead of N masked partial stores (the vector
    # store slot is the scarcest resource; lane-dense stores are the single
    # biggest measured lever on copy kernels).
    def kernel(*refs):
        in_refs, out_ref = refs[:-1], refs[-1]
        if len(in_refs) == 1:
            out_ref[...] = in_refs[0][...]
        else:
            out_ref[...] = jnp.concatenate([r[...] for r in in_refs], axis=-1)
    return kernel


# ----------------------------------------------------------------------------
# Tiling / pallas_call wrapper
# ----------------------------------------------------------------------------

def _choose_tile_rows(rows, sub, budget_rows, target_rows):
    tile = max(sub, min(budget_rows, target_rows))
    tile = max(sub, (tile // sub) * sub)
    if rows >= 4 * sub:
        # Keep at least ~4 grid steps: both v7x TensorCores get work and the
        # pipeline prologue/epilogue is hidden on every generation.
        cap = _round_up(-(-rows // 4), sub)
        tile = max(sub, min(tile, cap))
    if tile >= rows:
        return rows          # block == full array dim is always layout-legal
    return tile              # tile % sub == 0 -> (8,128)-rule satisfied


def _concat_early_pallas(modalities, vmem_budget, block_out_bytes):
    B, S = int(modalities[0].shape[0]), int(modalities[0].shape[1])
    dtype = modalities[0].dtype
    dims = [int(m.shape[2]) for m in modalities]
    d_total = sum(dims)
    rows = B * S
    itemsize = jnp.dtype(dtype).itemsize

    # (B, S, D_i) -> (B*S, D_i): layout-preserving reshape done by XLA.
    flat = [m.reshape(rows, d) for m, d in zip(modalities, dims)]

    sub = _sublane_multiple(dtype)

    # VMEM footprint per row, counting the 128-lane padding of every narrow
    # block plus 2x double-buffering of all inputs and the output.
    padded_cols = sum(_round_up(d, 128) for d in dims) + _round_up(d_total, 128)
    budget_rows = max(sub, vmem_budget // (2 * itemsize * padded_cols))

    # Bytes-per-step target so the ~0.35 us fixed per-step overhead is amortized.
    target_rows = max(sub, block_out_bytes // (d_total * itemsize))

    tile_rows = _choose_tile_rows(rows, sub, budget_rows, target_rows)
    grid = (pl.cdiv(rows, tile_rows),)

    in_specs = [pl.BlockSpec((tile_rows, d), lambda i: (i, 0)) for d in dims]
    out_spec = pl.BlockSpec((tile_rows, d_total), lambda i: (i, 0))

    out2d = pl.pallas_call(
        _make_concat_kernel(dims),
        out_shape=jax.ShapeDtypeStruct((rows, d_total), dtype),
        grid=grid,
        in_specs=in_specs,
        out_specs=out_spec,
        compiler_params=pltpu.CompilerParams(
            dimension_semantics=("parallel",),
        ),
    )(*flat)
    return out2d.reshape(B, S, d_total)


# ----------------------------------------------------------------------------
# Public entry point (ConcatEarly.forward equivalent)
# ----------------------------------------------------------------------------

def concat_early(modalities, *, force_pallas=False):
    """Pallas equivalent of ConcatEarly.forward: concat along dim=2."""
    modalities = [jnp.asarray(m) for m in modalities]
    assert len(modalities) >= 1
    B, S = int(modalities[0].shape[0]), int(modalities[0].shape[1])
    dtype = modalities[0].dtype
    for m in modalities:
        assert m.ndim == 3, "ConcatEarly expects (B, S, D_i) modalities"
        assert int(m.shape[0]) == B and int(m.shape[1]) == S, (
            "dims 0/1 must match for cat(dim=2)")
        assert m.dtype == dtype, "all modalities must share a dtype"

    fast_path_bytes, vmem_budget, block_out_bytes = _gen_params()

    d_total = sum(int(m.shape[2]) for m in modalities)
    out_bytes = B * S * d_total * jnp.dtype(dtype).itemsize

    if not force_pallas and out_bytes < fast_path_bytes:
        # Tiny call: kernel launch / pipeline prologue+epilogue dominates.
        return jnp.concatenate(modalities, axis=2)

    return _concat_early_pallas(modalities, vmem_budget, block_out_bytes)


# ----------------------------------------------------------------------------
# Self-test
# ----------------------------------------------------------------------------

if __name__ == "__main__":
    key = jax.random.PRNGKey(0)
    k1, k2, k3, k4, k5, k6, k7 = jax.random.split(key, 7)

    # Case 1: module's intended small use
    # (batch=2, seq=8, per-modality hidden dims 32 / 64 / 16) — exercises the
    # unaligned dense-store path with grid=1.
    x1 = jax.random.normal(k1, (2, 8, 32), dtype=jnp.float32)
    x2 = jax.random.normal(k2, (2, 8, 64), dtype=jnp.float32)
    x3 = jax.random.normal(k3, (2, 8, 16), dtype=jnp.float32)

    ref = jnp.concatenate([x1, x2, x3], axis=2)
    out = jax.block_until_ready(concat_early([x1, x2, x3], force_pallas=True))
    assert out.shape == ref.shape, (out.shape, ref.shape)
    assert jnp.array_equal(out, ref), "pallas path mismatch vs jnp.concatenate"

    out_auto = jax.block_until_ready(concat_early([x1, x2, x3]))
    assert jnp.array_equal(out_auto, ref), "fast path mismatch vs jnp.concatenate"

    # Case 2: multi-step row-tiled grid with a ragged last tile, unaligned
    # widths (128 + 40) -> dense-store path.
    y1 = jax.random.normal(k4, (2, 520, 128), dtype=jnp.float32)
    y2 = jax.random.normal(k5, (2, 520, 40), dtype=jnp.float32)
    ref2 = jnp.concatenate([y1, y2], axis=2)
    out2 = jax.block_until_ready(concat_early([y1, y2], force_pallas=True))
    assert out2.shape == ref2.shape, (out2.shape, ref2.shape)
    assert jnp.array_equal(out2, ref2), "tiled (unaligned) pallas path mismatch"

    # Case 3: all widths / offsets 128-lane aligned (128 + 256) -> per-slice
    # unmasked-store path, multi-step grid.
    z1 = jax.random.normal(k6, (2, 64, 128), dtype=jnp.float32)
    z2 = jax.random.normal(k7, (2, 64, 256), dtype=jnp.float32)
    ref3 = jnp.concatenate([z1, z2], axis=2)
    out3 = jax.block_until_ready(concat_early([z1, z2], force_pallas=True))
    assert out3.shape == ref3.shape, (out3.shape, ref3.shape)
    assert jnp.array_equal(out3, ref3), "tiled (aligned) pallas path mismatch"

    print("KERNEL_OK")
</pallas_src>

<mosaic_0001>
module attributes {stable_mosaic.version = 11 : i64} {
  func.func @kernel(%arg0: i32, %arg1: memref<16x32xf32, #tpu.memory_space<vmem>>, %arg2: memref<16x64xf32, #tpu.memory_space<vmem>>, %arg3: memref<16x16xf32, #tpu.memory_space<vmem>>, %arg4: memref<16x112xf32, #tpu.memory_space<vmem>>) attributes {dimension_semantics = [#tpu.dimension_semantics<parallel>], iteration_bounds = array<i64: 1>, scalar_prefetch = 0 : i64, scratch_operands = 0 : i64, tpu.core_type = #tpu.core_type<tc>, window_params = [{transform_indices = @transform_0, window_bounds = array<i64: 16, 32>}, {transform_indices = @transform_1, window_bounds = array<i64: 16, 64>}, {transform_indices = @transform_2, window_bounds = array<i64: 16, 16>}, {transform_indices = @transform_3, window_bounds = array<i64: 16, 112>}]} {
    %c0 = arith.constant 0 : index
    %c0_0 = arith.constant 0 : index
    %0 = vector.load %arg1[%c0, %c0_0] : memref<16x32xf32, #tpu.memory_space<vmem>>, vector<16x32xf32>
    %c0_1 = arith.constant 0 : index
    %c0_2 = arith.constant 0 : index
    %1 = vector.load %arg2[%c0_1, %c0_2] : memref<16x64xf32, #tpu.memory_space<vmem>>, vector<16x64xf32>
    %c0_3 = arith.constant 0 : index
    %c0_4 = arith.constant 0 : index
    %2 = vector.load %arg3[%c0_3, %c0_4] : memref<16x16xf32, #tpu.memory_space<vmem>>, vector<16x16xf32>
    %3 = tpu.concatenate %0, %1, %2 in 1 : vector<16x32xf32>, vector<16x64xf32>, vector<16x16xf32> -> vector<16x112xf32>
    %c0_5 = arith.constant 0 : index
    %c0_6 = arith.constant 0 : index
    %4 = vector.load %arg4[%c0_5, %c0_6] : memref<16x112xf32, #tpu.memory_space<vmem>>, vector<16x112xf32>
    tpu.vector_store %arg4[%c0_5, %c0_6], %3 {strides = array<i32>} : memref<16x112xf32, #tpu.memory_space<vmem>>, vector<16x112xf32>,
    return
  }
  func.func @transform_0(%arg0: i32) -> (i32, i32) {
    %c0_i32 = arith.constant 0 : i32
    %c0_i32_0 = arith.constant 0 : i32
    return %arg0, %c0_i32 : i32, i32
  }
  func.func @transform_1(%arg0: i32) -> (i32, i32) {
    %c0_i32 = arith.constant 0 : i32
    %c0_i32_0 = arith.constant 0 : i32
    return %arg0, %c0_i32 : i32, i32
  }
  func.func @transform_2(%arg0: i32) -> (i32, i32) {
    %c0_i32 = arith.constant 0 : i32
    %c0_i32_0 = arith.constant 0 : i32
    return %arg0, %c0_i32 : i32, i32
  }
  func.func @transform_3(%arg0: i32) -> (i32, i32) {
    %c0_i32 = arith.constant 0 : i32
    %c0_i32_0 = arith.constant 0 : i32
    return %arg0, %c0_i32 : i32, i32
  }
}

</mosaic_0001>

<llo_original>
// kernel: tpu_custom_call.1
$region0: #{tpu_custom_call.1}
  #allocation0 [shape = 'u32[]', space=smem, size = 0x4, offset = 0x4, fixed_abs, tag = 'smem constant byte address 0x4 - core index']
  #allocation1 [shape = 'u32[72,128]{1,0:T(1,128)}', space=vmem, size = 0x9000, scoped, tag = 'internal scratch']
  %s0 = inlined_call_operand.hbm [shape: f32[16,32], index: 0, kind: input, shape index: {}]
  %s1 = inlined_call_operand.hbm [shape: f32[16,64], index: 1, kind: input, shape index: {}]
  %s2 = inlined_call_operand.hbm [shape: f32[16,16], index: 2, kind: input, shape index: {}]
  %s3 = inlined_call_operand.hbm [shape: f32[16,112], index: 3, kind: output, shape index: {}]
  %s4 = sld [smem:[#allocation0]]
  $region34: #{tpu_custom_call.1} parent=0
    _
  %s6 = ssub.s32 1, %s4
  %s7 = scalar_select 0, %s6, %s4
  $region1: #{tpu_custom_call.1} parent=0
    #allocation2 [shape = 'u8[8192]{0}', space=vmem, size = 0x2000, scoped, tag = 'input window, operand 0, single buffered']
    #allocation3 [shape = 's32[1]{0}', space=sflag, size = 0x4, scoped, tag = 'scoped memory for tpu_custom_call.1']
    #allocation4 [shape = 's32[1]{0}', space=sflag, size = 0x4, scoped, tag = 'scoped memory for tpu_custom_call.1']
    #allocation5 [shape = 'u8[8192]{0}', space=vmem, size = 0x2000, scoped, tag = 'input window, operand 1, single buffered']
    #allocation6 [shape = 's32[1]{0}', space=sflag, size = 0x4, scoped, tag = 'scoped memory for tpu_custom_call.1']
    #allocation7 [shape = 'u8[8192]{0}', space=vmem, size = 0x2000, scoped, tag = 'input window, operand 2, single buffered']
    #allocation8 [shape = 'u8[8192]{0}', space=vmem, size = 0x2000, scoped, tag = 'output window, operand 0, single buffered']
    %8 = vsyncpa [#allocation3], 0
    %9 = vsyncpa [#allocation6], 0
    %10 = vsyncpa [#allocation4], 0
    // Predicated region
    $region2: #{tpu_custom_call.1} parent=1 // pred_check
      _
    $region3: #{tpu_custom_call.1} parent=1 // pred_check_branch
      %12 = sbr.rel (0) target = $region5
    $region4: #{tpu_custom_call.1} parent=1 // pred_region
      %14 = vsyncadd [#allocation3], 0
      %s15 = sshll.u32 %s0, 4
      %s16 = int_to_ptr.hbm [resolvable:$true] %s15
      %s17 = sshll.u32 [#allocation2], 4
      %s18 = int_to_ptr.vmem [resolvable:$true] %s17
      %23 = dma.hbm_to_vmem [thread:$0]  %s16, 256, %s18, [#allocation3], 128, 128, 8
    $region5: #{tpu_custom_call.1} parent=1 // pred_fallthru
      _
    // Predicated region
    $region6: #{tpu_custom_call.1} parent=1 // pred_check
      _
    $region7: #{tpu_custom_call.1} parent=1 // pred_check_branch
      %25 = sbr.rel (0) target = $region9
    $region8: #{tpu_custom_call.1} parent=1 // pred_region
      %27 = vsyncadd [#allocation6], 0
      %s28 = sshll.u32 %s1, 4
      %s29 = int_to_ptr.hbm [resolvable:$true] %s28
      %s30 = sshll.u32 [#allocation5], 4
      %s31 = int_to_ptr.vmem [resolvable:$true] %s30
      %36 = dma.hbm_to_vmem [thread:$0]  %s29, 256, %s31, [#allocation6], 128, 128, 8
    $region9: #{tpu_custom_call.1} parent=1 // pred_fallthru
      _
    // Predicated region
    $region10: #{tpu_custom_call.1} parent=1 // pred_check
      _
    $region11: #{tpu_custom_call.1} parent=1 // pred_check_branch
      %38 = sbr.rel (0) target = $region13
    $region12: #{tpu_custom_call.1} parent=1 // pred_region
      %40 = vsyncadd [#allocation6], 0
      %s41 = sshll.u32 %s2, 4
      %s42 = int_to_ptr.hbm [resolvable:$true] %s41
      %s43 = sshll.u32 [#allocation7], 4
      %s44 = int_to_ptr.vmem [resolvable:$true] %s43
      %49 = dma.hbm_to_vmem [thread:$0]  %s42, 256, %s44, [#allocation6], 128, 128, 8
    $region13: #{tpu_custom_call.1} parent=1 // pred_fallthru
      _
    // Predicated region
    $region14: #{tpu_custom_call.1} parent=1 // pred_check
      _
    $region15: #{tpu_custom_call.1} parent=1 // pred_check_branch
      %51 = sbr.rel (0) target = $region17
    $region16: #{tpu_custom_call.1} parent=1 // pred_region
      %53 = dma.done [#allocation3], 256
    $region17: #{tpu_custom_call.1} parent=1 // pred_fallthru
      _
    // Predicated region
    $region18: #{tpu_custom_call.1} parent=1 // pred_check
      _
    $region19: #{tpu_custom_call.1} parent=1 // pred_check_branch
      %55 = sbr.rel (0) target = $region21
    $region20: #{tpu_custom_call.1} parent=1 // pred_region
      %57 = dma.done [#allocation6], 256
    $region21: #{tpu_custom_call.1} parent=1 // pred_fallthru
      _
    // Predicated region
    $region22: #{tpu_custom_call.1} parent=1 // pred_check
      _
    $region23: #{tpu_custom_call.1} parent=1 // pred_check_branch
      %59 = sbr.rel (0) target = $region25
    $region24: #{tpu_custom_call.1} parent=1 // pred_region
      %61 = dma.done [#allocation6], 256
    $region25: #{tpu_custom_call.1} parent=1 // pred_fallthru
      _
    %v62 = vld [vmem:[#allocation2] sm:$0xff]
    %v63 = vld [vmem:[#allocation2 + $0x8] sm:$0xff]
    %v64 = vld [vmem:[#allocation5] sm:$0xff]
    %v65 = vld [vmem:[#allocation5 + $0x8] sm:$0xff]
    %v66 = vld [vmem:[#allocation7] sm:$0xff]
    %v67 = vld [vmem:[#allocation7 + $0x8] sm:$0xff]
    %70 = vrot.lane.b32.xlu0 %v64, 32
    %v71 = vpop.permute.xlu0 %70
    %72 = vrot.lane.b32.xlu0 %v65, 32
    %v73 = vpop.permute.xlu0 %72
    %78 = vrot.lane.b32.xlu0 %v66, 96
    %v79 = vpop.permute.xlu0 %78
    %80 = vrot.lane.b32.xlu0 %v67, 96
    %v81 = vpop.permute.xlu0 %80
    %vm84 = vcmask 261120
    %v85 = vsel %vm84, %v62, %v71
    %v86 = vsel %vm84, %v63, %v73
    %vm87 = vcmask 785408
    %v88 = vsel %vm87, %v85, %v79
    %v89 = vsel %vm87, %v86, %v81
    %vm90 = vcmask 916480
    %91 = vst.msk [vmem:[#allocation8] sm:$0xff] %vm90, %v88
    %92 = vst.msk [vmem:[#allocation8 + $0x8] sm:$0xff] %vm90, %v89
    // Predicated region
    $region26: #{tpu_custom_call.1} parent=1 // pred_check
      _
    $region27: #{tpu_custom_call.1} parent=1 // pred_check_branch
      %94 = sbr.rel (0) target = $region29
    $region28: #{tpu_custom_call.1} parent=1 // pred_region
      %96 = vsyncadd [#allocation4], 0
      %s97 = sshll.u32 [#allocation8], 4
      %s98 = int_to_ptr.vmem [resolvable:$true] %s97
      %s99 = sshll.u32 %s3, 4
      %s100 = int_to_ptr.hbm [resolvable:$true] %s99
      %105 = dma.vmem_to_hbm [thread:$0]  %s98, 256, %s100, [#allocation4], 128, 128, 8
    $region29: #{tpu_custom_call.1} parent=1 // pred_fallthru
      _
    // Predicated region
    $region30: #{tpu_custom_call.1} parent=1 // pred_check
      _
    $region31: #{tpu_custom_call.1} parent=1 // pred_check_branch
      %107 = sbr.rel (0) target = $region33
    $region32: #{tpu_custom_call.1} parent=1 // pred_region
      %109 = dma.done [#allocation4], 256
    $region33: #{tpu_custom_call.1} parent=1 // pred_fallthru
      _
    %110 = vsyncpa [#allocation3], 1
    %111 = vsyncpa [#allocation6], 1
    %112 = vsyncpa [#allocation4], 1

</llo_original>
